<compile_context>
chip_gen: v6e
topology: v6e:2x2x1
jax: 0.10.0
libtpu: 0.0.40
codegen_flags: <defaults>
</compile_context>

<pallas_src>
import functools
import math

import jax
import jax.numpy as jnp
from jax.experimental import pallas as pl
from jax.experimental.pallas import tpu as pltpu


# --------------------------------------------------------------------------
# Hardware-aware tiling / VMEM helpers
# --------------------------------------------------------------------------
def _vmem_capacity_bytes() -> int:
    try:
        info = pltpu.get_tpu_info()
        cap = getattr(info, "vmem_capacity_bytes", None)
        if cap:
            return int(cap)
    except Exception:
        pass
    return 64 << 20  # conservative default (v7x-sized VMEM)


def _vmem_cap() -> int:
    # Leave headroom for semaphores / compiler-internal scratch.
    return int(min(0.75 * _vmem_capacity_bytes(), 100 << 20))


def _tile_targets():
    # v7x (64 MiB VMEM / TC): smaller tiles; v5e/v6e (128 MiB): fatter tiles to
    # amortize the ~0.35 us per-grid-step overhead and cut weight re-streams.
    if _vmem_capacity_bytes() <= (64 << 20):
        return 256, 256
    return 512, 512


def _sublane(dtype) -> int:
    # 8 rows for 4-byte, 16 for 2-byte, 32 for 1-byte dtypes
    return {4: 8, 2: 16, 1: 32}.get(jnp.dtype(dtype).itemsize, 8)


def _pick_tile(size: int, target: int, multiple: int) -> int:
    """Largest tile <= target that is a multiple of `multiple` and divides
    `size`; falls back to the full dimension (always legal, no padding)."""
    if size <= target:
        return size
    t = (target // multiple) * multiple
    while t >= multiple:
        if size % t == 0:
            return t
        t -= multiple
    return size


def _vmem_budget(streamed_bytes: int, resident_bytes: int = 0) -> int:
    # Honest budget: streamed blocks are double-buffered (x2); resident
    # scratch / in-kernel temporaries are counted once.
    total = 2 * streamed_bytes + resident_bytes + (4 << 20)
    return int(min(max(total, 16 << 20), _vmem_cap()))


# --------------------------------------------------------------------------
# Fused (optional LayerNorm) -> matmul -> (+bias) -> (ReLU) -> (+residual)
# --------------------------------------------------------------------------
def _fused_matmul_kernel(*refs, has_ln, has_bias, has_relu, has_res, eps):
    idx = 0
    x_ref = refs[idx]; idx += 1
    if has_ln:
        g_ref, b_ref = refs[idx], refs[idx + 1]; idx += 2
    w_ref = refs[idx]; idx += 1
    if has_bias:
        bias_ref = refs[idx]; idx += 1
    if has_res:
        res_ref = refs[idx]; idx += 1
    o_ref = refs[idx]; idx += 1

    if has_ln:
        xn_ref = refs[idx]

        # LayerNorm once per row tile (column step j == 0); cached in VMEM
        # scratch and reused for j > 0. The x block index is constant in j so
        # its DMA is also skipped by the pipeline.
        @pl.when(pl.program_id(1) == 0)
        def _():
            xf = x_ref[...].astype(jnp.float32)
            mu = jnp.mean(xf, axis=-1, keepdims=True)
            var = jnp.mean(jnp.square(xf - mu), axis=-1, keepdims=True)
            xn = (xf - mu) * jax.lax.rsqrt(var + eps)
            xn = xn * g_ref[...].astype(jnp.float32) + b_ref[...].astype(jnp.float32)
            # Cast back to the storage dtype -> native (bf16) MXU path.
            xn_ref[...] = xn.astype(xn_ref.dtype)

        xin = xn_ref[...]
    else:
        xin = x_ref[...]

    # No f32 promotion of the operands; accumulate in f32 on the MXU.
    y = jnp.dot(xin, w_ref[...], preferred_element_type=jnp.float32)
    if has_bias:
        y = y + bias_ref[...].astype(jnp.float32)
    if has_relu:
        y = jnp.maximum(y, 0.0)
    if has_res:
        y = y + res_ref[...].astype(jnp.float32)
    o_ref[...] = y.astype(o_ref.dtype)


def fused_matmul(x2d, w, *, gamma=None, beta=None, bias=None, residual=None,
                 relu=False, eps=1e-5):
    """y = [LN(x) or x] @ w [+ bias] [ReLU] [+ residual]; x2d: (R,K), w: (K,N)."""
    R, K = x2d.shape
    Kw, N = w.shape
    assert K == Kw
    has_ln = gamma is not None
    has_bias = bias is not None
    has_res = residual is not None

    row_target, n_target = _tile_targets()
    row_tile = _pick_tile(R, row_target, _sublane(x2d.dtype))
    n_tile = _pick_tile(N, n_target, 128)
    grid = (R // row_tile, N // n_tile)

    xi = jnp.dtype(x2d.dtype).itemsize
    wi = jnp.dtype(w.dtype).itemsize

    in_specs = [pl.BlockSpec((row_tile, K), lambda i, j: (i, 0))]
    operands = [x2d]
    streamed = row_tile * K * xi
    if has_ln:
        in_specs += [pl.BlockSpec((1, K), lambda i, j: (0, 0)),
                     pl.BlockSpec((1, K), lambda i, j: (0, 0))]
        operands += [gamma.reshape(1, K), beta.reshape(1, K)]
        streamed += 2 * K * 4
    in_specs.append(pl.BlockSpec((K, n_tile), lambda i, j: (0, j)))
    operands.append(w)
    streamed += K * n_tile * wi
    if has_bias:
        in_specs.append(pl.BlockSpec((1, n_tile), lambda i, j: (0, j)))
        operands.append(bias.reshape(1, N))
        streamed += n_tile * 4
    if has_res:
        in_specs.append(pl.BlockSpec((row_tile, n_tile), lambda i, j: (i, j)))
        operands.append(residual)
        streamed += row_tile * n_tile * xi
    out_spec = pl.BlockSpec((row_tile, n_tile), lambda i, j: (i, j))
    streamed += row_tile * n_tile * xi

    scratch_shapes = []
    resident = row_tile * n_tile * 4  # f32 accumulator live in-kernel
    if has_ln:
        scratch_shapes.append(pltpu.VMEM((row_tile, K), x2d.dtype))
        resident += row_tile * K * (xi + 4)  # LN cache + f32 temporaries

    kernel = functools.partial(_fused_matmul_kernel, has_ln=has_ln,
                               has_bias=has_bias, has_relu=relu,
                               has_res=has_res, eps=eps)
    # With LN cached across column steps, the column axis must run
    # sequentially on one core; rows remain megacore-parallel.
    dims = ("parallel", "arbitrary") if has_ln else ("parallel", "parallel")
    return pl.pallas_call(
        kernel,
        out_shape=jax.ShapeDtypeStruct((R, N), x2d.dtype),
        grid_spec=pltpu.PrefetchScalarGridSpec(
            num_scalar_prefetch=0,
            grid=grid,
            in_specs=in_specs,
            out_specs=out_spec,
            scratch_shapes=scratch_shapes,
        ),
        compiler_params=pltpu.CompilerParams(
            dimension_semantics=dims,
            vmem_limit_bytes=_vmem_budget(streamed, resident),
        ),
    )(*operands)


# --------------------------------------------------------------------------
# Flash-style causal multi-head attention, reading heads directly from the
# packed (B*T, 3C) qkv tensor and writing a lane-dense (B*T, C) output.
# --------------------------------------------------------------------------
def _attention_kernel(q_ref, k_ref, v_ref, o_ref, acc_ref, m_ref, l_ref, *,
                      num_heads, head_dim, q_base, k_base, v_base,
                      q_tile, kv_tile, scale):
    qi = pl.program_id(1)
    kv = pl.program_id(2)

    @pl.when(kv == 0)
    def _():
        m_ref[...] = jnp.full(m_ref.shape, -jnp.inf, m_ref.dtype)
        l_ref[...] = jnp.zeros(l_ref.shape, l_ref.dtype)
        acc_ref[...] = jnp.zeros(acc_ref.shape, acc_ref.dtype)

    q_start = qi * q_tile
    kv_start = kv * kv_tile

    # Skip KV blocks that lie entirely above the causal diagonal.
    @pl.when(kv_start <= q_start + (q_tile - 1))
    def _():
        row = q_start + jax.lax.broadcasted_iota(jnp.int32, (q_tile, kv_tile), 0)
        col = kv_start + jax.lax.broadcasted_iota(jnp.int32, (q_tile, kv_tile), 1)
        causal = col <= row
        for h in range(num_heads):  # static unroll over heads
            hq = slice(q_base + h * head_dim, q_base + (h + 1) * head_dim)
            hk = slice(k_base + h * head_dim, k_base + (h + 1) * head_dim)
            hv = slice(v_base + h * head_dim, v_base + (h + 1) * head_dim)
            ho = slice(h * head_dim, (h + 1) * head_dim)

            # Pre-scale q (cheaper than scaling the (q,kv) score matrix);
            # keep operands in native dtype for the MXU fast path.
            qh = q_ref[:, hq] * scale
            kh = k_ref[:, hk]
            vh = v_ref[:, hv]
            s = jax.lax.dot_general(qh, kh, (((1,), (1,)), ((), ())),
                                    preferred_element_type=jnp.float32)
            s = jnp.where(causal, s, -1e30)

            m_prev = m_ref[:, h:h + 1]
            m_new = jnp.maximum(m_prev, jnp.max(s, axis=-1, keepdims=True))
            alpha = jnp.exp(m_prev - m_new)
            p = jnp.exp(s - m_new)
            l_ref[:, h:h + 1] = alpha * l_ref[:, h:h + 1] + jnp.sum(
                p, axis=-1, keepdims=True)
            acc_ref[:, ho] = alpha * acc_ref[:, ho] + jnp.dot(
                p.astype(vh.dtype), vh, preferred_element_type=jnp.float32)
            m_ref[:, h:h + 1] = m_new

    @pl.when(kv == pl.num_programs(2) - 1)
    def _():
        inv_l = pl.reciprocal(l_ref[...], approx=False)  # (q_tile, H)
        for h in range(num_heads):
            ho = slice(h * head_dim, (h + 1) * head_dim)
            o_ref[:, ho] = (acc_ref[:, ho] * inv_l[:, h:h + 1]).astype(o_ref.dtype)


def causal_attention(qkv, *, batch, seq_len, embed_dim, num_heads):
    """qkv: (B*T, 3C) packed [Q | K | V] -> (B*T, C) attention output."""
    B, T, C, H = batch, seq_len, embed_dim, num_heads
    Dh = C // H
    assert qkv.shape == (B * T, 3 * C)
    assert T % 8 == 0, "seq_len must be a multiple of 8 (sublane tiling)"
    # TODO(synk): ragged / non-multiple-of-8 sequence lengths not handled.

    q_target, kv_target = _tile_targets()
    q_tile = _pick_tile(T, min(q_target, 256), 8)
    kv_tile = _pick_tile(T, kv_target, 8)
    nq = T // q_tile
    nkv = T // kv_tile

    if C % 128 == 0:
        # Lane-aligned: fetch only the needed C-wide column block per operand.
        widths, col_idx, bases = C, (0, 1, 2), (0, 0, 0)
    else:
        # Fallback: fetch full-width blocks, slice columns inside the kernel.
        widths, col_idx, bases = 3 * C, (0, 0, 0), (0, C, 2 * C)

    def q_map(b, qi, kv):
        return (b * nq + qi, col_idx[0])

    def _kv_row(b, qi, kv):
        # Clamp to the last causally-needed KV block: repeated block indices
        # past the diagonal let the pipeline skip the redundant K/V DMA.
        last_needed = ((qi + 1) * q_tile - 1) // kv_tile
        return b * nkv + jnp.minimum(kv, last_needed)

    def k_map(b, qi, kv):
        return (_kv_row(b, qi, kv), col_idx[1])

    def v_map(b, qi, kv):
        return (_kv_row(b, qi, kv), col_idx[2])

    def o_map(b, qi, kv):
        return (b * nq + qi, 0)

    itemsize = jnp.dtype(qkv.dtype).itemsize
    streamed = (q_tile + 2 * kv_tile) * widths * itemsize + q_tile * C * itemsize
    resident = ((q_tile * C + 2 * q_tile * H) * 4        # acc / m / l scratch
                + 4 * q_tile * kv_tile * 4)              # live score temporaries

    kernel = functools.partial(
        _attention_kernel, num_heads=H, head_dim=Dh,
        q_base=bases[0], k_base=bases[1], v_base=bases[2],
        q_tile=q_tile, kv_tile=kv_tile, scale=Dh ** -0.5)

    return pl.pallas_call(
        kernel,
        out_shape=jax.ShapeDtypeStruct((B * T, C), qkv.dtype),
        grid_spec=pltpu.PrefetchScalarGridSpec(
            num_scalar_prefetch=0,
            grid=(B, nq, nkv),
            in_specs=[pl.BlockSpec((q_tile, widths), q_map),
                      pl.BlockSpec((kv_tile, widths), k_map),
                      pl.BlockSpec((kv_tile, widths), v_map)],
            out_specs=pl.BlockSpec((q_tile, C), o_map),
            scratch_shapes=[pltpu.VMEM((q_tile, C), jnp.float32),
                            pltpu.VMEM((q_tile, H), jnp.float32),
                            pltpu.VMEM((q_tile, H), jnp.float32)],
        ),
        compiler_params=pltpu.CompilerParams(
            dimension_semantics=("parallel", "parallel", "arbitrary"),
            vmem_limit_bytes=_vmem_budget(streamed, resident),
        ),
    )(qkv, qkv, qkv)


# --------------------------------------------------------------------------
# Block forward (Pallas) and pure-JAX reference
# --------------------------------------------------------------------------
def block_forward(x, params, num_heads, eps=1e-5):
    B, T, C = x.shape
    x2d = x.reshape(B * T, C)

    # LN1 fused into the packed no-bias QKV projection (one pass over x).
    qkv = fused_matmul(x2d, params["w_qkv"], gamma=params["ln1_g"],
                       beta=params["ln1_b"], eps=eps)            # (B*T, 3C)

    # Flash attention straight on the packed qkv (no split / transpose glue).
    attn = causal_attention(qkv, batch=B, seq_len=T, embed_dim=C,
                            num_heads=num_heads)                 # (B*T, C)

    # Output projection + bias + residual (dropout = identity in eval).
    x1 = fused_matmul(attn, params["w_proj"], bias=params["b_proj"],
                      residual=x2d)

    # LN2 fused into fc1, with bias + ReLU.
    h = fused_matmul(x1, params["w_fc1"], gamma=params["ln2_g"],
                     beta=params["ln2_b"], bias=params["b_fc1"],
                     relu=True, eps=eps)

    # fc2 + bias + residual (dropout = identity in eval).
    x2 = fused_matmul(h, params["w_fc2"], bias=params["b_fc2"], residual=x1)
    return x2.reshape(B, T, C)


def block_ref(x, params, num_heads, eps=1e-5):
    B, T, C = x.shape
    H = num_heads
    Dh = C // H

    def ln(a, g, b):
        mu = a.mean(-1, keepdims=True)
        var = ((a - mu) ** 2).mean(-1, keepdims=True)
        return (a - mu) / jnp.sqrt(var + eps) * g + b

    h = ln(x, params["ln1_g"], params["ln1_b"])
    qkv = h @ params["w_qkv"]
    q, k, v = jnp.split(qkv, 3, axis=-1)
    q = q.reshape(B, T, H, Dh).transpose(0, 2, 1, 3)
    k = k.reshape(B, T, H, Dh).transpose(0, 2, 1, 3)
    v = v.reshape(B, T, H, Dh).transpose(0, 2, 1, 3)
    s = jnp.einsum("bhqd,bhkd->bhqk", q, k) * Dh ** -0.5
    mask = jnp.tril(jnp.ones((T, T), dtype=bool))
    s = jnp.where(mask, s, -jnp.inf)
    p = jax.nn.softmax(s, axis=-1)
    o = jnp.einsum("bhqk,bhkd->bhqd", p, v)
    o = o.transpose(0, 2, 1, 3).reshape(B, T, C)
    x = o @ params["w_proj"] + params["b_proj"] + x
    h2 = ln(x, params["ln2_g"], params["ln2_b"])
    f = jax.nn.relu(h2 @ params["w_fc1"] + params["b_fc1"])
    x = f @ params["w_fc2"] + params["b_fc2"] + x
    return x


# --------------------------------------------------------------------------
if __name__ == "__main__":
    # Small but lane-aligned shapes so the tiling paths are actually exercised.
    B, T, C, H = 2, 8, 128, 4         # batch, seq, embed_dim, heads
    Dh = C // H
    Hidden = 4 * C

    key = jax.random.PRNGKey(0)
    ks = jax.random.split(key, 12)
    std = 1.0 / math.sqrt(C)

    x = jax.random.normal(ks[0], (B, T, C), dtype=jnp.float32)
    params = {
        # LayerNorm params (random gamma/beta to exercise the fused LN path).
        "ln1_g": 1.0 + 0.1 * jax.random.normal(ks[1], (C,), jnp.float32),
        "ln1_b": 0.1 * jax.random.normal(ks[2], (C,), jnp.float32),
        "ln2_g": 1.0 + 0.1 * jax.random.normal(ks[3], (C,), jnp.float32),
        "ln2_b": 0.1 * jax.random.normal(ks[4], (C,), jnp.float32),
        # Packed per-head QKV weights: [Wq | Wk | Wv], each (C, C), no bias.
        "w_qkv": std * jax.random.normal(ks[5], (C, 3 * C), jnp.float32),
        "w_proj": std * jax.random.normal(ks[6], (C, C), jnp.float32),
        "b_proj": 0.1 * jax.random.normal(ks[7], (C,), jnp.float32),
        "w_fc1": std * jax.random.normal(ks[8], (C, Hidden), jnp.float32),
        "b_fc1": 0.1 * jax.random.normal(ks[9], (Hidden,), jnp.float32),
        "w_fc2": (1.0 / math.sqrt(Hidden))
                 * jax.random.normal(ks[10], (Hidden, C), jnp.float32),
        "b_fc2": 0.1 * jax.random.normal(ks[11], (C,), jnp.float32),
    }

    out = jax.block_until_ready(block_forward(x, params, num_heads=H))
    ref = block_ref(x, params, num_heads=H)
    assert out.shape == x.shape
    err = jnp.max(jnp.abs(out - ref))
    assert jnp.allclose(out, ref, atol=2e-4, rtol=2e-4), f"mismatch vs reference: {err}"

    print("KERNEL_OK")
</pallas_src>

<mosaic_0001>
module attributes {stable_mosaic.version = 11 : i64} {
  func.func @_fused_matmul_kernel(%arg0: i32, %arg1: i32, %arg2: memref<16x128xf32, #tpu.memory_space<vmem>>, %arg3: memref<1x128xf32, #tpu.memory_space<vmem>>, %arg4: memref<1x128xf32, #tpu.memory_space<vmem>>, %arg5: memref<128x128xf32, #tpu.memory_space<vmem>>, %arg6: memref<16x128xf32, #tpu.memory_space<vmem>>, %arg7: memref<16x128xf32, #tpu.memory_space<vmem>>) attributes {dimension_semantics = [#tpu.dimension_semantics<parallel>, #tpu.dimension_semantics<arbitrary>], iteration_bounds = array<i64: 1, 3>, scalar_prefetch = 0 : i64, scratch_operands = 1 : i64, tpu.core_type = #tpu.core_type<tc>, window_params = [{transform_indices = @transform_0, window_bounds = array<i64: 16, 128>}, {pipeline_mode = #tpu.pipeline_mode<synchronous>, transform_indices = @transform_1, window_bounds = array<i64: 1, 128>}, {pipeline_mode = #tpu.pipeline_mode<synchronous>, transform_indices = @transform_2, window_bounds = array<i64: 1, 128>}, {transform_indices = @transform_3, window_bounds = array<i64: 128, 128>}, {transform_indices = @transform_4, window_bounds = array<i64: 16, 128>}]} {
    %c0_i32 = arith.constant 0 : i32
    %0 = arith.cmpi eq, %arg1, %c0_i32 : i32
    %1 = arith.extui %0 : i1 to i32
    %c0_i32_0 = arith.constant 0 : i32
    %2 = arith.cmpi ne, %1, %c0_i32_0 : i32
    scf.if %2 {
      %c0_6 = arith.constant 0 : index
      %c0_7 = arith.constant 0 : index
      %7 = vector.load %arg2[%c0_6, %c0_7] : memref<16x128xf32, #tpu.memory_space<vmem>>, vector<16x128xf32>
      %cst_8 = arith.constant dense<0.000000e+00> : vector<16xf32>
      %8 = vector.multi_reduction <add>, %7, %cst_8 [1] : vector<16x128xf32> to vector<16xf32>
      %9 = vector.shape_cast %8 : vector<16xf32> to vector<16x1xf32>
      %cst_9 = arith.constant 1.280000e+02 : f32
      %10 = vector.broadcast %cst_9 : f32 to vector<16x1xf32>
      %11 = arith.divf %9, %10 : vector<16x1xf32>
      %12 = vector.broadcast %11 : vector<16x1xf32> to vector<16x128xf32>
      %13 = arith.subf %7, %12 : vector<16x128xf32>
      %14 = arith.mulf %13, %13 : vector<16x128xf32>
      %cst_10 = arith.constant dense<0.000000e+00> : vector<16xf32>
      %15 = vector.multi_reduction <add>, %14, %cst_10 [1] : vector<16x128xf32> to vector<16xf32>
      %16 = vector.shape_cast %15 : vector<16xf32> to vector<16x1xf32>
      %cst_11 = arith.constant 1.280000e+02 : f32
      %17 = vector.broadcast %cst_11 : f32 to vector<16x1xf32>
      %18 = arith.divf %16, %17 : vector<16x1xf32>
      %19 = vector.broadcast %11 : vector<16x1xf32> to vector<16x128xf32>
      %20 = arith.subf %7, %19 : vector<16x128xf32>
      %cst_12 = arith.constant 9.99999974E-6 : f32
      %21 = vector.broadcast %cst_12 : f32 to vector<16x1xf32>
      %22 = arith.addf %18, %21 : vector<16x1xf32>
      %23 = math.rsqrt %22 : vector<16x1xf32>
      %24 = vector.broadcast %23 : vector<16x1xf32> to vector<16x128xf32>
      %25 = arith.mulf %20, %24 : vector<16x128xf32>
      %c0_13 = arith.constant 0 : index
      %c0_14 = arith.constant 0 : index
      %26 = vector.load %arg3[%c0_13, %c0_14] : memref<1x128xf32, #tpu.memory_space<vmem>>, vector<1x128xf32>
      %27 = vector.broadcast %26 : vector<1x128xf32> to vector<16x128xf32>
      %28 = arith.mulf %25, %27 : vector<16x128xf32>
      %c0_15 = arith.constant 0 : index
      %c0_16 = arith.constant 0 : index
      %29 = vector.load %arg4[%c0_15, %c0_16] : memref<1x128xf32, #tpu.memory_space<vmem>>, vector<1x128xf32>
      %30 = vector.broadcast %29 : vector<1x128xf32> to vector<16x128xf32>
      %31 = arith.addf %28, %30 : vector<16x128xf32>
      %c0_17 = arith.constant 0 : index
      %c0_18 = arith.constant 0 : index
      %32 = vector.load %arg7[%c0_17, %c0_18] : memref<16x128xf32, #tpu.memory_space<vmem>>, vector<16x128xf32>
      tpu.vector_store %arg7[%c0_17, %c0_18], %31 {strides = array<i32>} : memref<16x128xf32, #tpu.memory_space<vmem>>, vector<16x128xf32>,
    } else {
    }
    %c0 = arith.constant 0 : index
    %c0_1 = arith.constant 0 : index
    %3 = vector.load %arg7[%c0, %c0_1] : memref<16x128xf32, #tpu.memory_space<vmem>>, vector<16x128xf32>
    %c0_2 = arith.constant 0 : index
    %c0_3 = arith.constant 0 : index
    %4 = vector.load %arg5[%c0_2, %c0_3] : memref<128x128xf32, #tpu.memory_space<vmem>>, vector<128x128xf32>
    %cst = arith.constant dense<0.000000e+00> : vector<16x128xf32>
    %5 = tpu.matmul %3, %4, %cst {dimension_numbers = #tpu.dot_dimension_numbers<[1], [0], [0], [1], [0, 0, 1, 1], [], []>} : vector<16x128xf32>, vector<128x128xf32>, vector<16x128xf32> -> vector<16x128xf32>
    %c0_4 = arith.constant 0 : index
    %c0_5 = arith.constant 0 : index
    %6 = vector.load %arg6[%c0_4, %c0_5] : memref<16x128xf32, #tpu.memory_space<vmem>>, vector<16x128xf32>
    tpu.vector_store %arg6[%c0_4, %c0_5], %5 {strides = array<i32>} : memref<16x128xf32, #tpu.memory_space<vmem>>, vector<16x128xf32>,
    return
  }
  func.func @transform_0(%arg0: i32, %arg1: i32) -> (i32, i32) {
    %c0_i32 = arith.constant 0 : i32
    %c0_i32_0 = arith.constant 0 : i32
    return %arg0, %c0_i32 : i32, i32
  }
  func.func @transform_1(%arg0: i32, %arg1: i32) -> (i32, i32) {
    %c0_i32 = arith.constant 0 : i32
    %c0_i32_0 = arith.constant 0 : i32
    %c0_i32_1 = arith.constant 0 : i32
    return %c0_i32, %c0_i32_0 : i32, i32
  }
  func.func @transform_2(%arg0: i32, %arg1: i32) -> (i32, i32) {
    %c0_i32 = arith.constant 0 : i32
    %c0_i32_0 = arith.constant 0 : i32
    %c0_i32_1 = arith.constant 0 : i32
    return %c0_i32, %c0_i32_0 : i32, i32
  }
  func.func @transform_3(%arg0: i32, %arg1: i32) -> (i32, i32) {
    %c0_i32 = arith.constant 0 : i32
    %c0_i32_0 = arith.constant 0 : i32
    return %c0_i32, %arg1 : i32, i32
  }
  func.func @transform_4(%arg0: i32, %arg1: i32) -> (i32, i32) {
    %c0_i32 = arith.constant 0 : i32
    return %arg0, %arg1 : i32, i32
  }
}

</mosaic_0001>

<llo_original>
// kernel: tpu_custom_call.1
$region0: #{tpu_custom_call.1}
  #allocation0 [shape = 'u32[]', space=smem, size = 0x4, offset = 0x4, fixed_abs, tag = 'smem constant byte address 0x4 - core index']
  #allocation1 [shape = 'u32[144,128]{1,0:T(1,128)}', space=vmem, size = 0x12000, scoped, tag = 'internal scratch']
  #allocation2 [shape = 'f32[16,128]{1,0:T(8,128)}', space=vmem, size = 0x2000, scoped, tag = 'scratch operand']
  %s0 = inlined_call_operand.hbm [shape: f32[16,128], index: 0, kind: input, shape index: {}]
  %s1 = inlined_call_operand.vmem [shape: f32[1,128], index: 1, kind: input, shape index: {}]
  %s2 = inlined_call_operand.vmem [shape: f32[1,128], index: 2, kind: input, shape index: {}]
  %s3 = inlined_call_operand.hbm [shape: f32[128,384], index: 3, kind: input, shape index: {}]
  %s4 = inlined_call_operand.hbm [shape: f32[16,384], index: 4, kind: output, shape index: {}]
  %s5 = sld [smem:[#allocation0]]
  $region61: #{tpu_custom_call.1} parent=0
    _
  %s7 = ssub.s32 1, %s5
  %s8 = scalar_select 0, %s7, %s5
  $region1: #{tpu_custom_call.1} parent=0
    #allocation3 [shape = 'u8[8192]{0}', space=vmem, size = 0x2000, scoped, tag = 'input window, operand 0, single buffered']
    #allocation4 [shape = 's32[2]{0}', space=sflag, size = 0x8, scoped, tag = 'scoped memory for tpu_custom_call.1']
    #allocation5 [shape = 's32[2]{0}', space=sflag, size = 0x8, scoped, tag = 'scoped memory for tpu_custom_call.1']
    #allocation6 [shape = 'u8[131072]{0}', space=vmem, size = 0x20000, scoped, tag = 'input window, operand 3']
    #allocation7 [shape = 's32[2]{0}', space=sflag, size = 0x8, scoped, tag = 'scoped memory for tpu_custom_call.1']
    #allocation8 [shape = 'u8[16384]{0}', space=vmem, size = 0x4000, scoped, tag = 'output window, operand 0']
    %9 = vsyncpa [#allocation4], 0
    %10 = vsyncpa [#allocation7], 0
    %s11 = scalar_lea.sflag [#allocation7], 1
    %12 = vsyncpa %s11, 0
    %13 = vsyncpa [#allocation5], 0
    %s14 = scalar_lea.sflag [#allocation5], 1
    %15 = vsyncpa %s14, 0
    loop: start=0, step=1, limit=5
    $region2: #{tpu_custom_call.1} parent=1 // loop_pre_header
      _
    $region3: #{tpu_custom_call.1} parent=1 // loop_header
      %s17 = sphi 0, %s21
      %p18 = scmp.ge.s32.totalorder %s17, 5
      %s24 = sphi 0, %s36
      %s25 = sphi 0, %s32
      %s26 = sphi 0, %s24
      %s27 = sphi 0, %s25
      %s28 = sphi 0, %s26
      %s29 = sphi 0, %s27
      %s39 = sphi 0, %s41
      %s42 = sphi 0, %s39
      %s43 = sphi 0, %s42
      %s59 = sphi 0, %s43
      %s63 = sphi 0, %s63
      %s65 = sphi 0, %s63
      %s66 = sphi 0, %s65
      %s80 = sphi 0, %s66
      %s84 = sphi 0, %s84
      %s86 = sphi 0, %s84
      %s87 = sphi 0, %s86
      %s101 = sphi 0, %s87
      %s107 = sphi 0, %s109
      %s110 = sphi 0, %s107
      %s111 = sphi 0, %s110
      %s127 = sphi 0, %s111
      %s135 = sphi 0, %s137
      %s138 = sphi 0, %s135
      %s139 = sphi 0, %s138
      %s155 = sphi 0, %s139
    $region4: #{tpu_custom_call.1} parent=1 // loop_header_branch
      %20 = sbr.rel (%p18) target = $region8
    $region5: #{tpu_custom_call.1} parent=1 // loop_body
      %s22 = ssub.s32 %s17, 1
      %s23 = ssub.s32 %s17, 2
      %s30 = sadd.s32 1, %s25
      %p31 = scmp.ge.s32.totalorder %s30, 3
      %s32 = scalar_select %p31, 0, %s30
      %s33 = sadd.s32 1, %s24
      %s34 = scalar_select %p31, %s33, %s24
      %p35 = scmp.ge.s32.totalorder %s34, 1
      %s36 = scalar_select %p35, 0, %s34
      %s37 = ssub.s32 %s24, %s36
      %p38 = scmp.eq.s32.totalorder %s37, 0
      %s40 = sadd.s32 %s39, 1
      %s41 = scalar_select %p38, %s39, %s40
      %p44 = pneg %p38
      %p45 = scmp.eq.s32.totalorder %s17, 2
      %p46 = por %p44, %p45
      %p47 = scmp.ne.s32.totalorder %s39, %s42
      %p48 = scmp.eq.s32.totalorder %s17, 0
      %p49 = por %p47, %p48
      %p50 = scmp.ne.s32.totalorder %s39, %s42
      %p51 = scmp.eq.s32.totalorder %s22, 2
      %p52 = por %p50, %p51
      %p53 = scmp.ne.s32.totalorder %s42, %s43
      %p54 = scmp.eq.s32.totalorder %s22, 0
      %p55 = por %p53, %p54
      %p56 = scmp.ne.s32.totalorder %s42, %s43
      %p57 = scmp.eq.s32.totalorder %s23, 2
      %p58 = por %p56, %p57
      %p60 = scmp.ne.s32.totalorder %s43, %s59
      %p61 = scmp.eq.s32.totalorder %s23, 0
      %p62 = por %p60, %p61
      %s64 = sadd.s32 %s63, 1
      %p67 = scmp.eq.s32.totalorder %s17, 2
      %p68 = scmp.ne.s32.totalorder %s63, %s65
      %p69 = scmp.eq.s32.totalorder %s17, 0
      %p70 = por %p68, %p69
      %p71 = scmp.ne.s32.totalorder %s63, %s65
      %p72 = scmp.eq.s32.totalorder %s22, 2
      %p73 = por %p71, %p72
      %p74 = scmp.ne.s32.totalorder %s65, %s66
      %p75 = scmp.eq.s32.totalorder %s22, 0
      %p76 = por %p74, %p75
      %p77 = scmp.ne.s32.totalorder %s65, %s66
      %p78 = scmp.eq.s32.totalorder %s23, 2
      %p79 = por %p77, %p78
      %p81 = scmp.ne.s32.totalorder %s66, %s80
      %p82 = scmp.eq.s32.totalorder %s23, 0
      %p83 = por %p81, %p82
      %s85 = sadd.s32 %s84, 1
      %p88 = scmp.eq.s32.totalorder %s17, 2
      %p89 = scmp.ne.s32.totalorder %s84, %s86
      %p90 = scmp.eq.s32.totalorder %s17, 0
      %p91 = por %p89, %p90
      %p92 = scmp.ne.s32.totalorder %s84, %s86
      %p93 = scmp.eq.s32.totalorder %s22, 2
      %p94 = por %p92, %p93
      %p95 = scmp.ne.s32.totalorder %s86, %s87
      %p96 = scmp.eq.s32.totalorder %s22, 0
      %p97 = por %p95, %p96
      %p98 = scmp.ne.s32.totalorder %s86, %s87
      %p99 = scmp.eq.s32.totalorder %s23, 2
      %p100 = por %p98, %p99
      %p102 = scmp.ne.s32.totalorder %s87, %s101
      %p103 = scmp.eq.s32.totalorder %s23, 0
      %p104 = por %p102, %p103
      %s105 = ssub.s32 %s25, %s32
      %p106 = scmp.eq.s32.totalorder %s105, 0
      %s108 = sadd.s32 %s107, 1
      %s109 = scalar_select %p106, %s107, %s108
      %p112 = pneg %p106
      %p113 = scmp.eq.s32.totalorder %s17, 2
      %p114 = por %p112, %p113
      %p115 = scmp.ne.s32.totalorder %s107, %s110
      %p116 = scmp.eq.s32.totalorder %s17, 0
      %p117 = por %p115, %p116
      %p118 = scmp.ne.s32.totalorder %s107, %s110
      %p119 = scmp.eq.s32.totalorder %s22, 2
      %p120 = por %p118, %p119
      %p121 = scmp.ne.s32.totalorder %s110, %s111
      %p122 = scmp.eq.s32.totalorder %s22, 0
      %p123 = por %p121, %p122
      %p124 = scmp.ne.s32.totalorder %s110, %s111
      %p125 = scmp.eq.s32.totalorder %s23, 2
      %p126 = por %p124, %p125
      %p128 = scmp.ne.s32.totalorder %s111, %s127
      %p129 = scmp.eq.s32.totalorder %s23, 0
      %p130 = por %p128, %p129
      %s131 = ssub.s32 %s24, %s36
      %s132 = ssub.s32 %s25, %s32
      %s133 = sor.u32 %s131, %s132
      %p134 = scmp.eq.s32.totalorder %s133, 0
      %s136 = sadd.s32 %s135, 1
      %s137 = scalar_select %p134, %s135, %s136
      %p140 = pneg %p134
      %p141 = scmp.eq.s32.totalorder %s17, 2
      %p142 = por %p140, %p141
      %p143 = scmp.ne.s32.totalorder %s135, %s138
      %p144 = scmp.eq.s32.totalorder %s17, 0
      %p145 = por %p143, %p144
      %p146 = scmp.ne.s32.totalorder %s135, %s138
      %p147 = scmp.eq.s32.totalorder %s22, 2
      %p148 = por %p146, %p147
      %p149 = scmp.ne.s32.totalorder %s138, %s139
      %p150 = scmp.eq.s32.totalorder %s22, 0
      %p151 = por %p149, %p150
      %p152 = scmp.ne.s32.totalorder %s138, %s139
      %p153 = scmp.eq.s32.totalorder %s23, 2
      %p154 = por %p152, %p153
      %p156 = scmp.ne.s32.totalorder %s139, %s155
      %p157 = scmp.eq.s32.totalorder %s23, 0
      %p158 = por %p156, %p157
      %p159 = scmp.le.s32.totalorder 1, %s17
      %p160 = scmp.lt.s32.totalorder %s17, 4
      %p161 = pnand %p159, %p160
      %p162 = pneg %p161
      // Predicated region
      $region9: #{tpu_custom_call.1} parent=5 // pred_check
        _
      $region10: #{tpu_custom_call.1} parent=5 // pred_check_branch
        %164 = sbr.rel (%p161) target = $region12
      $region11: #{tpu_custom_call.1} parent=5 // pred_region
        %s165 = ssub.s32 %s17, 1
        // Predicated region
        $region13: #{tpu_custom_call.1} parent=11 // pred_check
          %p166 = pneg %p55
        $region14: #{tpu_custom_call.1} parent=11 // pred_check_branch
          %168 = sbr.rel (%p166) target = $region16
        $region15: #{tpu_custom_call.1} parent=11 // pred_region
          %s169 = smul.u32 2, %s26
          %s171 = ssub.s32 256, 256
          %172 = vsyncadd [#allocation4], %s171
          %s173 = smul.addr %s169, 128
          %s174 = scalar_lea.hbm %s0, %s173
          %s175 = sshll.u32 [#allocation3], 4
          %s176 = int_to_ptr.vmem [resolvable:$true] %s175
          %181 = dma.hbm_to_vmem [thread:$0]  %s174, 256, %s176, [#allocation4], 128, 128, 8
        $region16: #{tpu_custom_call.1} parent=11 // pred_fallthru
          _
        // Predicated region
        $region17: #{tpu_custom_call.1} parent=11 // pred_check
          %p182 = pneg %p76
        $region18: #{tpu_custom_call.1} parent=11 // pred_check_branch
          %184 = sbr.rel (%p182) target = $region20
        $region19: #{tpu_custom_call.1} parent=11 // pred_region
          _
        $region20: #{tpu_custom_call.1} parent=11 // pred_fallthru
          _
        // Predicated region
        $region21: #{tpu_custom_call.1} parent=11 // pred_check
          %p185 = pneg %p97
        $region22: #{tpu_custom_call.1} parent=11 // pred_check_branch
          %187 = sbr.rel (%p185) target = $region24
        $region23: #{tpu_custom_call.1} parent=11 // pred_region
          _
        $region24: #{tpu_custom_call.1} parent=11 // pred_fallthru
          _
      $region12: #{tpu_custom_call.1} parent=5 // pred_fallthru
        _
      %p188 = scmp.lt.s32.totalorder %s17, 3
      // Predicated region
      $region25: #{tpu_custom_call.1} parent=5 // pred_check
        %p189 = pneg %p188
      $region26: #{tpu_custom_call.1} parent=5 // pred_check_branch
        %191 = sbr.rel (%p189) target = $region28
      $region27: #{tpu_custom_call.1} parent=5 // pred_region
        // Predicated region
        $region29: #{tpu_custom_call.1} parent=27 // pred_check
          %p192 = pneg %p117
        $region30: #{tpu_custom_call.1} parent=27 // pred_check_branch
          %194 = sbr.rel (%p192) target = $region32
        $region31: #{tpu_custom_call.1} parent=27 // pred_region
          %s195 = sand.u32 %s107, 1
          %s196 = scalar_lea.sflag [#allocation7], %s195
          %s197 = sand.u32 %s107, 1
          %s198 = smul.addr %s197, 128
          %s199 = scalar_lea.vmem [#allocation6], %s198
          %s201 = ssub.s32 2048, 2048
          %202 = vsyncadd %s196, %s201
          %s203 = smul.addr %s25, 128
          %s204 = scalar_lea.hbm %s3, %s203
          %s205 = sshll.u32 %s199, 4
          %s206 = int_to_ptr.vmem [resolvable:$true] %s205
          %211 = dma.hbm_to_vmem [thread:$0]  %s204, 2048, %s206, %s196, 384, 128, 8
        $region32: #{tpu_custom_call.1} parent=27 // pred_fallthru
          _
      $region28: #{tpu_custom_call.1} parent=5 // pred_fallthru
        _
      %p212 = scmp.le.s32.totalorder 1, %s17
      %p213 = scmp.lt.s32.totalorder %s17, 4
      %p214 = pnand %p212, %p213
      %p215 = pneg %p214
      // Predicated region
      $region33: #{tpu_custom_call.1} parent=5 // pred_check
        _
      $region34: #{tpu_custom_call.1} parent=5 // pred_check_branch
        %217 = sbr.rel (%p214) target = $region36
      $region35: #{tpu_custom_call.1} parent=5 // pred_region
        %s218 = ssub.s32 %s17, 1
        // Predicated region
        $region37: #{tpu_custom_call.1} parent=35 // pred_check
          %p219 = pneg %p55
        $region38: #{tpu_custom_call.1} parent=35 // pred_check_branch
          %221 = sbr.rel (%p219) target = $region40
        $region39: #{tpu_custom_call.1} parent=35 // pred_region
          %222 = dma.done [#allocation4], 256
        $region40: #{tpu_custom_call.1} parent=35 // pred_fallthru
          _
        %s223 = sand.u32 %s110, 1
        %s224 = scalar_lea.sflag [#allocation7], %s223
        %s225 = sand.u32 %s110, 1
        %s226 = smul.addr %s225, 128
        %s227 = scalar_lea.vmem [#allocation6], %s226
        // Predicated region
        $region41: #{tpu_custom_call.1} parent=35 // pred_check
          %p228 = pneg %p123
        $region42: #{tpu_custom_call.1} parent=35 // pred_check_branch
          %230 = sbr.rel (%p228) target = $region44
        $region43: #{tpu_custom_call.1} parent=35 // pred_region
          %231 = dma.done %s224, 2048
        $region44: #{tpu_custom_call.1} parent=35 // pred_fallthru
          _
        %p232 = pneg %p55
        %p233 = pneg %p52
        %p234 = pneg %p76
        %p235 = pneg %p73
        %p236 = pneg %p97
        %p237 = pneg %p94
        %s238 = sand.u32 %s110, 1
        %s239 = scalar_lea.sflag [#allocation7], %s238
        %s240 = sand.u32 %s110, 1
        %s241 = smul.addr %s240, 128
        %s242 = scalar_lea.vmem [#allocation6], %s241
        %p243 = pneg %p123
        %p244 = pneg %p120
        %p245 = pneg %p151
        %p246 = pneg %p148
        %s247 = sand.u32 %s138, 1
        %s248 = scalar_lea.sflag [#allocation5], %s247
        %s249 = sand.u32 %s138, 1
        %s250 = smul.addr %s249, 16
        %s251 = scalar_lea.vmem [#allocation8], %s250
        %s252 = smul.u32 2, %s26
        %s253 = smul.u32 2, %s26
        %p254 = scmp.eq.s32.totalorder %s27, 0
        // Predicated region
        $region45: #{tpu_custom_call.1} parent=35 // pred_check
          %p255 = pneg %p254
        $region46: #{tpu_custom_call.1} parent=35 // pred_check_branch
          %257 = sbr.rel (%p255) target = $region48
        $region47: #{tpu_custom_call.1} parent=35 // pred_region
          %v258 = vld [vmem:[#allocation3] sm:$0xff]
          %v259 = vld [vmem:[#allocation3 + $0x8] sm:$0xff]
          %260 = vadd.xlane.f32.xlu0 %v258
          %v261 = vpop.xlane.xlu0 %260
          %262 = vadd.xlane.f32.xlu0 %v259
          %v263 = vpop.xlane.xlu0 %262
          %v264 = vrcp.pop 128.0
          %v265 = vmul.f32 %v261, %v264
          %v266 = vmul.f32 %v263, %v264
          %v267 = vsub.f32 %v258, %v265
          %v268 = vsub.f32 %v259, %v266
          %v269 = vmul.f32 %v267, %v267
          %v270 = vmul.f32 %v268, %v268
          %271 = vadd.xlane.f32.xlu0 %v269
          %v272 = vpop.xlane.xlu0 %271
          %273 = vadd.xlane.f32.xlu0 %v270
          %v274 = vpop.xlane.xlu0 %273
          %v275 = vmul.f32 %v272, %v264
          %v276 = vmul.f32 %v274, %v264
          %v277 = vadd.f32 %v275, 1e-05
          %v278 = vadd.f32 %v276, 1e-05
          %v279 = vrsqrt.pop %v277
          %v280 = vrsqrt.pop %v278
          %v281 = vmul.f32 %v267, %v279
          %v282 = vmul.f32 %v268, %v280
          %v283 = vld [vmem:[%s1] sm:$0x1]
          %v285 = vlaneseq
          %v286 = vshrl.u32 %v285, 7
          %v287 = vsub.s32 0, %v286
          %v288 = vrot.slane %v283, %v287
          %v290 = vmul.f32 %v281, %v288
          %v291 = vmul.f32 %v282, %v288
          %v292 = vld [vmem:[%s2] sm:$0x1]
          %v294 = vlaneseq
          %v295 = vshrl.u32 %v294, 7
          %v296 = vsub.s32 0, %v295
          %v297 = vrot.slane %v292, %v296
          %v299 = vadd.f32 %v290, %v297
          %v300 = vadd.f32 %v291, %v297
          %301 = vst [vmem:[#allocation2] sm:$0xff] %v299
          %302 = vst [vmem:[#allocation2 + $0x8] sm:$0xff] %v300
        $region48: #{tpu_custom_call.1} parent=35 // pred_fallthru
          _
        %v303 = vld [vmem:[#allocation2] sm:$0xff]
        %v304 = vld [vmem:[#allocation2 + $0x8] sm:$0xff]
        %v305 = vld [vmem:[%s227] sm:$0xff]
        %v306 = vld [vmem:[%s227 + $0x8] sm:$0xff]
        %v307 = vld [vmem:[%s227 + $0x10] sm:$0xff]
        %v308 = vld [vmem:[%s227 + $0x18] sm:$0xff]
        %v309 = vld [vmem:[%s227 + $0x20] sm:$0xff]
        %v310 = vld [vmem:[%s227 + $0x28] sm:$0xff]
        %v311 = vld [vmem:[%s227 + $0x30] sm:$0xff]
        %v312 = vld [vmem:[%s227 + $0x38] sm:$0xff]
        %v313 = vld [vmem:[%s227 + $0x40] sm:$0xff]
        %v314 = vld [vmem:[%s227 + $0x48] sm:$0xff]
        %v315 = vld [vmem:[%s227 + $0x50] sm:$0xff]
        %v316 = vld [vmem:[%s227 + $0x58] sm:$0xff]
        %v317 = vld [vmem:[%s227 + $0x60] sm:$0xff]
        %v318 = vld [vmem:[%s227 + $0x68] sm:$0xff]
        %v319 = vld [vmem:[%s227 + $0x70] sm:$0xff]
        %v320 = vld [vmem:[%s227 + $0x78] sm:$0xff]
        %321 = vmatprep.subr.mxu0 0.0
        %322 = vmatpush1.msra.mxu0 %v320
        %323 = vmatprep.subr.mxu0 0.0
        %324 = vmatpush1.msra.mxu0 %v319
        %325 = vmatprep.subr.mxu0 0.0
        %326 = vmatpush1.msra.mxu0 %v318
        %327 = vmatprep.subr.mxu0 0.0
        %328 = vmatpush1.msra.mxu0 %v317
        %329 = vmatprep.subr.mxu0 0.0
        %330 = vmatpush1.msra.mxu0 %v316
        %331 = vmatprep.subr.mxu0 0.0
        %332 = vmatpush1.msra.mxu0 %v315
        %333 = vmatprep.subr.mxu0 0.0
        %334 = vmatpush1.msra.mxu0 %v314
        %335 = vmatprep.subr.mxu0 0.0
        %336 = vmatpush1.msra.mxu0 %v313
        %337 = vmatprep.subr.mxu0 0.0
        %338 = vmatpush1.msra.mxu0 %v312
        %339 = vmatprep.subr.mxu0 0.0
        %340 = vmatpush1.msra.mxu0 %v311
        %341 = vmatprep.subr.mxu0 0.0
        %342 = vmatpush1.msra.mxu0 %v310
        %343 = vmatprep.subr.mxu0 0.0
        %344 = vmatpush1.msra.mxu0 %v309
        %345 = vmatprep.subr.mxu0 0.0
        %346 = vmatpush1.msra.mxu0 %v308
        %347 = vmatprep.subr.mxu0 0.0
        %348 = vmatpush1.msra.mxu0 %v307
        %349 = vmatprep.subr.mxu0 0.0
        %350 = vmatpush1.msra.mxu0 %v306
        %351 = vmatprep.subr.mxu0 0.0
        %352 = vmatpush1.msra.mxu0 %v305
        %353 = vmatprep.subr.mxu0 0.0
        %354 = vmatpush2.msra.mxu0 0.0
        %355 = vmatprep.subr.mxu0 0.0
        %356 = vmatpush2.msra.mxu0 0.0
        %357 = vmatprep.subr.mxu0 0.0
        %358 = vmatpush2.msra.mxu0 0.0
        %359 = vmatprep.subr.mxu0 0.0
        %360 = vmatpush2.msra.mxu0 0.0
        %361 = vmatprep.subr.mxu0 0.0
        %362 = vmatpush2.msra.mxu0 0.0
        %363 = vmatprep.subr.mxu0 0.0
        %364 = vmatpush2.msra.mxu0 0.0
        %365 = vmatprep.subr.mxu0 0.0
        %366 = vmatpush2.msra.mxu0 0.0
        %367 = vmatprep.subr.mxu0 0.0
        %368 = vmatpush2.msra.mxu0 0.0
        %369 = vmatprep.subr.mxu0 0.0
        %370 = vmatpush2.msra.mxu0 0.0
        %371 = vmatprep.subr.mxu0 0.0
        %372 = vmatpush2.msra.mxu0 0.0
        %373 = vmatprep.subr.mxu0 0.0
        %374 = vmatpush2.msra.mxu0 0.0
        %375 = vmatprep.subr.mxu0 0.0
        %376 = vmatpush2.msra.mxu0 0.0
        %377 = vmatprep.subr.mxu0 0.0
        %378 = vmatpush2.msra.mxu0 0.0
        %379 = vmatprep.subr.mxu0 0.0
        %380 = vmatpush2.msra.mxu0 0.0
        %381 = vmatprep.subr.mxu0 0.0
        %382 = vmatpush2.msra.mxu0 0.0
        %383 = vmatprep.subr.mxu0 0.0
        %384 = vmatpush2.msra.mxu0 0.0
        %385 = vmatprep.mubr.f32.mxu0 0.0
        %386 = vmatmul.mubr.f32.gmra.mxu0 %v303
        %v387 = vpop.f32.mrf.mxu0
        %v388 = vadd.f32 0.0, %v387
        %v389 = vpop.f32.mrf.mxu0
        %390 = vmatprep.mubr.f32.mxu0 0.0
        %391 = vmatmul.mubr.f32.gmra.mxu0 %v304
        %v392 = vpop.f32.mrf.mxu0
        %v393 = vadd.f32 0.0, %v392
        %v394 = vpop.f32.mrf.mxu0
        %395 = vdwg.mxu0
        %396 = vst [vmem:[%s251] sm:$0xff] %v388
        %397 = vst [vmem:[%s251 + $0x8] sm:$0xff] %v393
        %s398 = sand.u32 %s138, 1
        %s399 = scalar_lea.sflag [#allocation5], %s398
        %s400 = sand.u32 %s138, 1
        %s401 = smul.addr %s400, 16
        %s402 = scalar_lea.vmem [#allocation8], %s401
        // Predicated region
        $region49: #{tpu_custom_call.1} parent=35 // pred_check
          %p403 = pneg %p148
        $region50: #{tpu_custom_call.1} parent=35 // pred_check_branch
          %405 = sbr.rel (%p403) target = $region52
        $region51: #{tpu_custom_call.1} parent=35 // pred_region
          %s406 = smul.u32 2, %s26
          %s408 = ssub.s32 256, 256
          %409 = vsyncadd %s399, %s408
          %s410 = smul.addr %s406, 3
          %s411 = sadd.s32 %s27, %s410
          %s412 = smul.addr %s411, 128
          %s413 = scalar_lea.hbm %s4, %s412
          %s414 = sshll.u32 %s402, 4
          %s415 = int_to_ptr.vmem [resolvable:$true] %s414
          %420 = dma.vmem_to_hbm [thread:$0]  %s415, 256, %s413, %s399, 128, 384, 8
        $region52: #{tpu_custom_call.1} parent=35 // pred_fallthru
          _
      $region36: #{tpu_custom_call.1} parent=5 // pred_fallthru
        _
      %p421 = scmp.le.s32.totalorder 2, %s17
      // Predicated region
      $region53: #{tpu_custom_call.1} parent=5 // pred_check
        %p422 = pneg %p421
      $region54: #{tpu_custom_call.1} parent=5 // pred_check_branch
        %424 = sbr.rel (%p422) target = $region56
      $region55: #{tpu_custom_call.1} parent=5 // pred_region
        %s425 = ssub.s32 %s17, 2
        // Predicated region
        $region57: #{tpu_custom_call.1} parent=55 // pred_check
          %p426 = pneg %p154
        $region58: #{tpu_custom_call.1} parent=55 // pred_check_branch
          %428 = sbr.rel (%p426) target = $region60
        $region59: #{tpu_custom_call.1} parent=55 // pred_region
          %s429 = sand.u32 %s139, 1
          %s430 = scalar_lea.sflag [#allocation5], %s429
          %s431 = sand.u32 %s139, 1
          %s432 = smul.addr %s431, 16
          %s433 = scalar_lea.vmem [#allocation8], %s432
          %434 = dma.done %s430, 256
        $region60: #{tpu_custom_call.1} parent=55 // pred_fallthru
          _
      $region56: #{tpu_custom_call.1} parent=5 // pred_fallthru
        _
    $region6: #{tpu_custom_call.1} parent=1 // loop_footer
      %s21 = sadd.s32 1, %s17
    $region7: #{tpu_custom_call.1} parent=1 // loop_footer_branch
      %16 = sbr.rel target = $region3
    $region8: #{tpu_custom_call.1} parent=1 // loop_exit
      _
    %435 = vsyncpa [#allocation4], 1
    %s436 = scalar_lea.sflag [#allocation4], 1
    %437 = vsyncpa %s436, 1
    %438 = vsyncpa [#allocation7], 1
    %s439 = scalar_lea.sflag [#allocation7], 1
    %440 = vsyncpa %s439, 1
    %441 = vsyncpa [#allocation5], 1
    %s442 = scalar_lea.sflag [#allocation5], 1
    %443 = vsyncpa %s442, 1

</llo_original>
